<compile_context>
chip_gen: v7x
topology: tpu7x:2x2x1
jax: 0.10.0
libtpu: 0.0.40
codegen_flags: <defaults>
</compile_context>

<pallas_src>
import jax
import jax.numpy as jnp
from jax.experimental import pallas as pl
from jax.experimental.pallas import tpu as pltpu


LANE = 128


def _round_up(n, m):
    return ((n + m - 1) // m) * m


def _cdiv(a, b):
    return (a + b - 1) // b


_ACTIVATIONS = {
    "tanh": jnp.tanh,
    "relu": lambda v: jnp.maximum(v, 0.0),
    "sigmoid": jax.nn.sigmoid,
}


# ----------------------------------------------------------------------------
# One-time parameter prep (hoisted out of the per-call jit path).
# params: list of (w, b) with w = (in, out), last entry is the value head.
# Hidden widths are zero-padded to multiples of 128 (numerically exact: padded
# activation columns hit zero weight rows downstream); matmul operands are cast
# to bf16; biases stay f32.  The value head is stored as a (1, H_last_pad) row.
# ----------------------------------------------------------------------------
def prepare_value_params(params, compute_dtype=jnp.bfloat16):
    *hidden_layers, (wv, bv) = params
    prepped = []
    prev_pad = hidden_layers[0][0].shape[0] if hidden_layers else wv.shape[0]
    for w, b in hidden_layers:
        k, n = w.shape
        npad = _round_up(n, LANE)
        wp = jnp.zeros((prev_pad, npad), compute_dtype).at[:k, :n].set(
            w.astype(compute_dtype))
        bp = jnp.zeros((1, npad), jnp.float32).at[:, :n].set(
            b.reshape(1, n).astype(jnp.float32))
        prepped.append((wp, bp))
        prev_pad = npad
    k = wv.shape[0]
    wvp = jnp.zeros((1, prev_pad), compute_dtype).at[:, :k].set(
        wv.reshape(1, k).astype(compute_dtype))
    bvp = jnp.asarray(bv, jnp.float32).reshape(1, 1)
    prepped.append((wvp, bvp))
    return prepped


# ----------------------------------------------------------------------------
# Kernel factory: one batch tile through the whole MLP.
# refs = (x_ref, w1, b1, ..., wN, bN, w_head, b_head, out_ref)
# All (padded) weights are tiny -> full-extent blocks with constant index_map,
# i.e. resident in VMEM across grid steps.
# ----------------------------------------------------------------------------
def _make_kernel(num_hidden, act):
    def kernel(*refs):
        x_ref, *p_refs, out_ref = refs
        h = x_ref[...]
        for l in range(num_hidden):
            w_ref = p_refs[2 * l]
            b_ref = p_refs[2 * l + 1]
            # bf16 operands, f32 accumulate on the MXU; bias/act in f32.
            h = jnp.dot(h.astype(jnp.bfloat16), w_ref[...],
                        preferred_element_type=jnp.float32)
            h = act(h + b_ref[...])
        wv_ref = p_refs[2 * num_hidden]
        bv_ref = p_refs[2 * num_hidden + 1]
        # Value head: (1, Hp) x (tb, Hp) contracted over the last dims -> (1, tb)
        # (lane-dense packed output row; no 128-wide padded head matmul).
        v = jax.lax.dot_general(
            wv_ref[...], h.astype(jnp.bfloat16),
            (((1,), (1,)), ((), ())),
            preferred_element_type=jnp.float32)
        out_ref[...] = (v + bv_ref[...]).astype(out_ref.dtype)
    return kernel


def value_forward(x, prepped_params, *, batch_tile=2048, activation="tanh"):
    """Value-network forward pass with a Pallas TPU kernel.

    x:              (B, state_dim) float32 (unpadded)
    prepped_params: output of prepare_value_params()
    returns         (B, 1) float32
    """
    act = _ACTIVATIONS[activation]
    B, D = x.shape
    layers = list(prepped_params)
    num_hidden = len(layers) - 1

    # --- batch tiling: no padded x copy, ragged last tile, >=2 tiles when the
    #     batch is big enough so v7x's two TensorCores both get work. ---------
    if B <= LANE:
        tb = _round_up(B, 8)
    else:
        n0 = max(2, _cdiv(B, int(batch_tile)))
        tb = _round_up(_cdiv(B, n0), LANE)
    num_tiles = _cdiv(B, tb)
    Nt = num_tiles * tb

    flat_params = []
    in_specs = [pl.BlockSpec((tb, D), lambda i: (i, 0))]  # x tile, unpadded features
    # TODO(synk): if the x DMA is still exposed on very small state_dim, add
    # pipeline_mode=pl.Buffered(3) to the x BlockSpec above.
    for w, b in layers:
        flat_params += [w, b]
        in_specs += [pl.BlockSpec(w.shape, lambda i: (0, 0)),   # resident weight
                     pl.BlockSpec(b.shape, lambda i: (0, 0))]   # resident bias

    # --- cost estimate for the XLA scheduler -----------------------------------
    flops = 0
    trans = 0
    bytes_accessed = B * D * 4 + Nt * 4
    for idx, (w, b) in enumerate(layers):
        if idx < num_hidden:
            flops += 2 * Nt * w.shape[0] * w.shape[1]
            trans += Nt * w.shape[1]
        else:
            flops += 2 * Nt * w.shape[1]
        bytes_accessed += w.size * w.dtype.itemsize + b.size * b.dtype.itemsize

    out = pl.pallas_call(
        _make_kernel(num_hidden, act),
        out_shape=jax.ShapeDtypeStruct((1, Nt), jnp.float32),
        grid_spec=pltpu.PrefetchScalarGridSpec(
            num_scalar_prefetch=0,
            grid=(num_tiles,),
            in_specs=in_specs,
            out_specs=pl.BlockSpec((1, tb), lambda i: (0, i)),  # packed value row
        ),
        compiler_params=pltpu.CompilerParams(
            dimension_semantics=("parallel",),   # shard batch tiles across TCs
            vmem_limit_bytes=32 * 1024 * 1024,
        ),
        cost_estimate=pl.CostEstimate(
            flops=int(flops),
            transcendentals=int(trans),
            bytes_accessed=int(bytes_accessed),
        ),
    )(x, *flat_params)

    # Valid values are the first B lanes; garbage rows of a ragged last tile are
    # row-isolated and dropped here.
    return out[0, :B].reshape(B, 1)


# ----------------------------------------------------------------------------
# Deterministic parameter init mimicking nn.Linear's default (uniform in
# +/- 1/sqrt(fan_in)), plus the value_head scaling from __init__:
#   value_head.weight *= 0.1 ; value_head.bias *= 0.0
# Returns a list of (w, b) with w = (in_features, out_features).
# ----------------------------------------------------------------------------
def init_value_params(key, state_dim, hidden_size=(100, 100)):
    dims = (state_dim,) + tuple(hidden_size) + (1,)
    params = []
    keys = jax.random.split(key, 2 * (len(dims) - 1))
    for idx in range(len(dims) - 1):
        fan_in, fan_out = dims[idx], dims[idx + 1]
        bound = 1.0 / (fan_in ** 0.5)
        w = jax.random.uniform(keys[2 * idx], (fan_in, fan_out), jnp.float32,
                               -bound, bound)
        b = jax.random.uniform(keys[2 * idx + 1], (1, fan_out), jnp.float32,
                               -bound, bound)
        params.append((w, b))
    wv, bv = params[-1]
    params[-1] = (wv * 0.1, bv * 0.0)
    return params


# Pure-JAX references.
def value_forward_ref(x, params, activation="tanh"):
    act = _ACTIVATIONS[activation]
    h = x
    for w, b in params[:-1]:
        h = act(h @ w + b)
    wv, bv = params[-1]
    return h @ wv + bv


def value_forward_ref_matched(x, params, activation="tanh"):
    """Reference mimicking the kernel's bf16-operand / f32-accumulate matmuls."""
    act = _ACTIVATIONS[activation]
    bf = jnp.bfloat16
    h = x
    for w, b in params[:-1]:
        h = act(jnp.dot(h.astype(bf), w.astype(bf),
                        preferred_element_type=jnp.float32) + b)
    wv, bv = params[-1]
    return jnp.dot(h.astype(bf), wv.astype(bf),
                   preferred_element_type=jnp.float32) + bv


if __name__ == "__main__":
    key = jax.random.PRNGKey(0)
    k_param, k_x = jax.random.split(key)

    # Small shapes consistent with the module: state_dim=16, hidden=(32, 32).
    # Batch 200 -> two 128-row tiles (ragged last tile + both-TC split on v7x).
    batch, state_dim = 200, 16
    hidden_size = (32, 32)

    params = init_value_params(k_param, state_dim, hidden_size)
    prepped = prepare_value_params(params)          # one-time param prep
    x = jax.random.normal(k_x, (batch, state_dim), jnp.float32)

    out = jax.block_until_ready(value_forward(x, prepped))
    assert out.shape == (batch, 1)

    ref_matched = value_forward_ref_matched(x, params)
    ref_f32 = value_forward_ref(x, params)
    assert jnp.allclose(out, ref_matched, atol=5e-3, rtol=5e-3), \
        float(jnp.max(jnp.abs(out - ref_matched)))
    assert jnp.allclose(out, ref_f32, atol=5e-2, rtol=5e-2), \
        float(jnp.max(jnp.abs(out - ref_f32)))

    # Single-tile small-batch path (exercises a ragged boundary block on x).
    x_small = jax.random.normal(jax.random.PRNGKey(1), (37, state_dim), jnp.float32)
    out_small = jax.block_until_ready(value_forward(x_small, prepped))
    assert out_small.shape == (37, 1)
    ref_small = value_forward_ref_matched(x_small, params)
    assert jnp.allclose(out_small, ref_small, atol=5e-3, rtol=5e-3)

    print("KERNEL_OK")
</pallas_src>

<mosaic_0001>
module attributes {stable_mosaic.version = 11 : i64} {
  func.func @kernel(%arg0: i32, %arg1: memref<128x16xf32, #tpu.memory_space<vmem>>, %arg2: memref<16x128xbf16, #tpu.memory_space<vmem>>, %arg3: memref<1x128xf32, #tpu.memory_space<vmem>>, %arg4: memref<128x128xbf16, #tpu.memory_space<vmem>>, %arg5: memref<1x128xf32, #tpu.memory_space<vmem>>, %arg6: memref<1x128xbf16, #tpu.memory_space<vmem>>, %arg7: memref<1x1xf32, #tpu.memory_space<vmem>>, %arg8: memref<1x128xf32, #tpu.memory_space<vmem>>) attributes {dimension_semantics = [#tpu.dimension_semantics<parallel>], iteration_bounds = array<i64: 2>, scalar_prefetch = 0 : i64, scratch_operands = 0 : i64, tpu.core_type = #tpu.core_type<tc>, window_params = [{transform_indices = @transform_0, window_bounds = array<i64: 128, 16>}, {pipeline_mode = #tpu.pipeline_mode<synchronous>, transform_indices = @transform_1, window_bounds = array<i64: 16, 128>}, {pipeline_mode = #tpu.pipeline_mode<synchronous>, transform_indices = @transform_2, window_bounds = array<i64: 1, 128>}, {pipeline_mode = #tpu.pipeline_mode<synchronous>, transform_indices = @transform_3, window_bounds = array<i64: 128, 128>}, {pipeline_mode = #tpu.pipeline_mode<synchronous>, transform_indices = @transform_4, window_bounds = array<i64: 1, 128>}, {pipeline_mode = #tpu.pipeline_mode<synchronous>, transform_indices = @transform_5, window_bounds = array<i64: 1, 128>}, {pipeline_mode = #tpu.pipeline_mode<synchronous>, transform_indices = @transform_6, window_bounds = array<i64: 1, 1>}, {transform_indices = @transform_7, window_bounds = array<i64: 1, 128>}]} {
    %c0 = arith.constant 0 : index
    %c0_0 = arith.constant 0 : index
    %0 = vector.load %arg1[%c0, %c0_0] : memref<128x16xf32, #tpu.memory_space<vmem>>, vector<128x16xf32>
    %1 = arith.truncf %0 : vector<128x16xf32> to vector<128x16xbf16>
    %c0_1 = arith.constant 0 : index
    %c0_2 = arith.constant 0 : index
    %2 = vector.load %arg2[%c0_1, %c0_2] : memref<16x128xbf16, #tpu.memory_space<vmem>>, vector<16x128xbf16>
    %cst = arith.constant dense<0.000000e+00> : vector<128x128xf32>
    %3 = tpu.matmul %1, %2, %cst {dimension_numbers = #tpu.dot_dimension_numbers<[1], [0], [0], [1], [0, 0, 1, 1], [], []>} : vector<128x16xbf16>, vector<16x128xbf16>, vector<128x128xf32> -> vector<128x128xf32>
    %c0_3 = arith.constant 0 : index
    %c0_4 = arith.constant 0 : index
    %4 = vector.load %arg3[%c0_3, %c0_4] : memref<1x128xf32, #tpu.memory_space<vmem>>, vector<1x128xf32>
    %5 = vector.broadcast %4 : vector<1x128xf32> to vector<128x128xf32>
    %6 = arith.addf %3, %5 : vector<128x128xf32>
    %7 = math.tanh %6 : vector<128x128xf32>
    %8 = arith.truncf %7 : vector<128x128xf32> to vector<128x128xbf16>
    %c0_5 = arith.constant 0 : index
    %c0_6 = arith.constant 0 : index
    %9 = vector.load %arg4[%c0_5, %c0_6] : memref<128x128xbf16, #tpu.memory_space<vmem>>, vector<128x128xbf16>
    %cst_7 = arith.constant dense<0.000000e+00> : vector<128x128xf32>
    %10 = tpu.matmul %8, %9, %cst_7 {dimension_numbers = #tpu.dot_dimension_numbers<[1], [0], [0], [1], [0, 0, 1, 1], [], []>} : vector<128x128xbf16>, vector<128x128xbf16>, vector<128x128xf32> -> vector<128x128xf32>
    %c0_8 = arith.constant 0 : index
    %c0_9 = arith.constant 0 : index
    %11 = vector.load %arg5[%c0_8, %c0_9] : memref<1x128xf32, #tpu.memory_space<vmem>>, vector<1x128xf32>
    %12 = vector.broadcast %11 : vector<1x128xf32> to vector<128x128xf32>
    %13 = arith.addf %10, %12 : vector<128x128xf32>
    %14 = math.tanh %13 : vector<128x128xf32>
    %c0_10 = arith.constant 0 : index
    %c0_11 = arith.constant 0 : index
    %15 = vector.load %arg6[%c0_10, %c0_11] : memref<1x128xbf16, #tpu.memory_space<vmem>>, vector<1x128xbf16>
    %16 = arith.truncf %14 : vector<128x128xf32> to vector<128x128xbf16>
    %cst_12 = arith.constant dense<0.000000e+00> : vector<1x128xf32>
    %17 = tpu.matmul %15, %16, %cst_12 {dimension_numbers = #tpu.dot_dimension_numbers<[1], [1], [0], [0], [0, 0, 1, 0], [], []>} : vector<1x128xbf16>, vector<128x128xbf16>, vector<1x128xf32> -> vector<1x128xf32>
    %c0_13 = arith.constant 0 : index
    %c0_14 = arith.constant 0 : index
    %18 = vector.load %arg7[%c0_13, %c0_14] : memref<1x1xf32, #tpu.memory_space<vmem>>, vector<1x1xf32>
    %19 = vector.broadcast %18 : vector<1x1xf32> to vector<1x128xf32>
    %20 = arith.addf %17, %19 : vector<1x128xf32>
    %c0_15 = arith.constant 0 : index
    %c0_16 = arith.constant 0 : index
    %21 = vector.load %arg8[%c0_15, %c0_16] : memref<1x128xf32, #tpu.memory_space<vmem>>, vector<1x128xf32>
    tpu.vector_store %arg8[%c0_15, %c0_16], %20 {strides = array<i32>} : memref<1x128xf32, #tpu.memory_space<vmem>>, vector<1x128xf32>,
    return
  }
  func.func @transform_0(%arg0: i32) -> (i32, i32) {
    %c0_i32 = arith.constant 0 : i32
    %c0_i32_0 = arith.constant 0 : i32
    return %arg0, %c0_i32 : i32, i32
  }
  func.func @transform_1(%arg0: i32) -> (i32, i32) {
    %c0_i32 = arith.constant 0 : i32
    %c0_i32_0 = arith.constant 0 : i32
    %c0_i32_1 = arith.constant 0 : i32
    return %c0_i32, %c0_i32_0 : i32, i32
  }
  func.func @transform_2(%arg0: i32) -> (i32, i32) {
    %c0_i32 = arith.constant 0 : i32
    %c0_i32_0 = arith.constant 0 : i32
    %c0_i32_1 = arith.constant 0 : i32
    return %c0_i32, %c0_i32_0 : i32, i32
  }
  func.func @transform_3(%arg0: i32) -> (i32, i32) {
    %c0_i32 = arith.constant 0 : i32
    %c0_i32_0 = arith.constant 0 : i32
    %c0_i32_1 = arith.constant 0 : i32
    return %c0_i32, %c0_i32_0 : i32, i32
  }
  func.func @transform_4(%arg0: i32) -> (i32, i32) {
    %c0_i32 = arith.constant 0 : i32
    %c0_i32_0 = arith.constant 0 : i32
    %c0_i32_1 = arith.constant 0 : i32
    return %c0_i32, %c0_i32_0 : i32, i32
  }
  func.func @transform_5(%arg0: i32) -> (i32, i32) {
    %c0_i32 = arith.constant 0 : i32
    %c0_i32_0 = arith.constant 0 : i32
    %c0_i32_1 = arith.constant 0 : i32
    return %c0_i32, %c0_i32_0 : i32, i32
  }
  func.func @transform_6(%arg0: i32) -> (i32, i32) {
    %c0_i32 = arith.constant 0 : i32
    %c0_i32_0 = arith.constant 0 : i32
    %c0_i32_1 = arith.constant 0 : i32
    return %c0_i32, %c0_i32_0 : i32, i32
  }
  func.func @transform_7(%arg0: i32) -> (i32, i32) {
    %c0_i32 = arith.constant 0 : i32
    %c0_i32_0 = arith.constant 0 : i32
    return %c0_i32, %arg0 : i32, i32
  }
}

</mosaic_0001>

<llo_original>
// kernel: tpu_custom_call.1
$region0: #{tpu_custom_call.1}
  #allocation0 [shape = 'u32[]', space=smem, size = 0x4, offset = 0x4, fixed_abs, tag = 'smem constant byte address 0x4 - core index']
  #allocation1 [shape = 'u32[144,128]{1,0:T(1,128)}', space=vmem, size = 0x12000, scoped, tag = 'internal scratch']
  #allocation2 [shape = 'f32[1,1]{1,0:T(1,128)S(1)}', space=vmem, size = 0x200, scoped, tag = 'scoped memory for tpu_custom_call.1']
  %s0 = inlined_call_operand.vmem [shape: f32[200,16], index: 0, kind: input, shape index: {}]
  %s1 = inlined_call_operand.vmem [shape: bf16[16,128], index: 1, kind: input, shape index: {}]
  %s2 = inlined_call_operand.vmem [shape: f32[1,128], index: 2, kind: input, shape index: {}]
  %s3 = inlined_call_operand.vmem [shape: bf16[128,128], index: 3, kind: input, shape index: {}]
  %s4 = inlined_call_operand.vmem [shape: f32[1,128], index: 4, kind: input, shape index: {}]
  %s5 = inlined_call_operand.vmem [shape: bf16[1,128], index: 5, kind: input, shape index: {}]
  %s6 = inlined_call_operand.<no memory space> [shape: f32[1,1], index: 6, kind: input, shape index: {}]
  %s7 = inlined_call_operand.hbm [shape: f32[1,256], index: 7, kind: output, shape index: {}]
  %s8 = sld [smem:[#allocation0]]
  $region61: #{tpu_custom_call.1} parent=0
    _
  %s10 = ssub.s32 1, %s8
  %s11 = scalar_select 0, %s10, %s8
  %v12 = vstv %s6
  %13 = vst [vmem:[#allocation2] sm:$0x1] %v12
  $region1: #{tpu_custom_call.1} parent=0
    #allocation3 [shape = 'u8[1024]{0}', space=vmem, size = 0x400, scoped, tag = 'output window, operand 0']
    #allocation4 [shape = 's32[2]{0}', space=sflag, size = 0x8, scoped, tag = 'scoped memory for tpu_custom_call.1']
    %14 = vsyncpa [#allocation4], 0
    %s15 = scalar_lea.sflag [#allocation4], 1
    %16 = vsyncpa %s15, 0
    loop: start=0, step=1, limit=4
    $region2: #{tpu_custom_call.1} parent=1 // loop_pre_header
      _
    $region3: #{tpu_custom_call.1} parent=1 // loop_header
      %s18 = sphi 0, %s22
      %p19 = scmp.ge.s32.totalorder %s18, 4
      %s28 = sphi 0, %s30
      %s31 = sphi 0, %s28
      %s32 = sphi 0, %s31
      %s48 = sphi 0, %s32
      %s52 = sphi 0, %s52
      %s54 = sphi 0, %s52
      %s55 = sphi 0, %s54
      %s69 = sphi 0, %s55
      %s73 = sphi 0, %s73
      %s75 = sphi 0, %s73
      %s76 = sphi 0, %s75
      %s90 = sphi 0, %s76
      %s94 = sphi 0, %s94
      %s96 = sphi 0, %s94
      %s97 = sphi 0, %s96
      %s111 = sphi 0, %s97
      %s115 = sphi 0, %s115
      %s117 = sphi 0, %s115
      %s118 = sphi 0, %s117
      %s132 = sphi 0, %s118
      %s136 = sphi 0, %s136
      %s138 = sphi 0, %s136
      %s139 = sphi 0, %s138
      %s153 = sphi 0, %s139
      %s157 = sphi 0, %s157
      %s159 = sphi 0, %s157
      %s160 = sphi 0, %s159
      %s174 = sphi 0, %s160
      %s180 = sphi 0, %s182
      %s183 = sphi 0, %s180
      %s184 = sphi 0, %s183
      %s200 = sphi 0, %s184
    $region4: #{tpu_custom_call.1} parent=1 // loop_header_branch
      %21 = sbr.rel (%p19) target = $region8
    $region5: #{tpu_custom_call.1} parent=1 // loop_body
      %s23 = ssub.s32 %s18, 1
      %s24 = ssub.s32 %s18, 2
      %s25 = sadd.s32 %s18, 1
      %s26 = ssub.s32 %s18, %s25
      %p27 = scmp.eq.s32.totalorder %s26, 0
      %s29 = sadd.s32 %s28, 1
      %s30 = scalar_select %p27, %s28, %s29
      %p33 = pneg %p27
      %p34 = scmp.eq.s32.totalorder %s18, 1
      %p35 = por %p33, %p34
      %p36 = scmp.ne.s32.totalorder %s28, %s31
      %p37 = scmp.eq.s32.totalorder %s18, 0
      %p38 = por %p36, %p37
      %p39 = scmp.ne.s32.totalorder %s28, %s31
      %p40 = scmp.eq.s32.totalorder %s23, 1
      %p41 = por %p39, %p40
      %p42 = scmp.ne.s32.totalorder %s31, %s32
      %p43 = scmp.eq.s32.totalorder %s23, 0
      %p44 = por %p42, %p43
      %p45 = scmp.ne.s32.totalorder %s31, %s32
      %p46 = scmp.eq.s32.totalorder %s24, 1
      %p47 = por %p45, %p46
      %p49 = scmp.ne.s32.totalorder %s32, %s48
      %p50 = scmp.eq.s32.totalorder %s24, 0
      %p51 = por %p49, %p50
      %s53 = sadd.s32 %s52, 1
      %p56 = scmp.eq.s32.totalorder %s18, 1
      %p57 = scmp.ne.s32.totalorder %s52, %s54
      %p58 = scmp.eq.s32.totalorder %s18, 0
      %p59 = por %p57, %p58
      %p60 = scmp.ne.s32.totalorder %s52, %s54
      %p61 = scmp.eq.s32.totalorder %s23, 1
      %p62 = por %p60, %p61
      %p63 = scmp.ne.s32.totalorder %s54, %s55
      %p64 = scmp.eq.s32.totalorder %s23, 0
      %p65 = por %p63, %p64
      %p66 = scmp.ne.s32.totalorder %s54, %s55
      %p67 = scmp.eq.s32.totalorder %s24, 1
      %p68 = por %p66, %p67
      %p70 = scmp.ne.s32.totalorder %s55, %s69
      %p71 = scmp.eq.s32.totalorder %s24, 0
      %p72 = por %p70, %p71
      %s74 = sadd.s32 %s73, 1
      %p77 = scmp.eq.s32.totalorder %s18, 1
      %p78 = scmp.ne.s32.totalorder %s73, %s75
      %p79 = scmp.eq.s32.totalorder %s18, 0
      %p80 = por %p78, %p79
      %p81 = scmp.ne.s32.totalorder %s73, %s75
      %p82 = scmp.eq.s32.totalorder %s23, 1
      %p83 = por %p81, %p82
      %p84 = scmp.ne.s32.totalorder %s75, %s76
      %p85 = scmp.eq.s32.totalorder %s23, 0
      %p86 = por %p84, %p85
      %p87 = scmp.ne.s32.totalorder %s75, %s76
      %p88 = scmp.eq.s32.totalorder %s24, 1
      %p89 = por %p87, %p88
      %p91 = scmp.ne.s32.totalorder %s76, %s90
      %p92 = scmp.eq.s32.totalorder %s24, 0
      %p93 = por %p91, %p92
      %s95 = sadd.s32 %s94, 1
      %p98 = scmp.eq.s32.totalorder %s18, 1
      %p99 = scmp.ne.s32.totalorder %s94, %s96
      %p100 = scmp.eq.s32.totalorder %s18, 0
      %p101 = por %p99, %p100
      %p102 = scmp.ne.s32.totalorder %s94, %s96
      %p103 = scmp.eq.s32.totalorder %s23, 1
      %p104 = por %p102, %p103
      %p105 = scmp.ne.s32.totalorder %s96, %s97
      %p106 = scmp.eq.s32.totalorder %s23, 0
      %p107 = por %p105, %p106
      %p108 = scmp.ne.s32.totalorder %s96, %s97
      %p109 = scmp.eq.s32.totalorder %s24, 1
      %p110 = por %p108, %p109
      %p112 = scmp.ne.s32.totalorder %s97, %s111
      %p113 = scmp.eq.s32.totalorder %s24, 0
      %p114 = por %p112, %p113
      %s116 = sadd.s32 %s115, 1
      %p119 = scmp.eq.s32.totalorder %s18, 1
      %p120 = scmp.ne.s32.totalorder %s115, %s117
      %p121 = scmp.eq.s32.totalorder %s18, 0
      %p122 = por %p120, %p121
      %p123 = scmp.ne.s32.totalorder %s115, %s117
      %p124 = scmp.eq.s32.totalorder %s23, 1
      %p125 = por %p123, %p124
      %p126 = scmp.ne.s32.totalorder %s117, %s118
      %p127 = scmp.eq.s32.totalorder %s23, 0
      %p128 = por %p126, %p127
      %p129 = scmp.ne.s32.totalorder %s117, %s118
      %p130 = scmp.eq.s32.totalorder %s24, 1
      %p131 = por %p129, %p130
      %p133 = scmp.ne.s32.totalorder %s118, %s132
      %p134 = scmp.eq.s32.totalorder %s24, 0
      %p135 = por %p133, %p134
      %s137 = sadd.s32 %s136, 1
      %p140 = scmp.eq.s32.totalorder %s18, 1
      %p141 = scmp.ne.s32.totalorder %s136, %s138
      %p142 = scmp.eq.s32.totalorder %s18, 0
      %p143 = por %p141, %p142
      %p144 = scmp.ne.s32.totalorder %s136, %s138
      %p145 = scmp.eq.s32.totalorder %s23, 1
      %p146 = por %p144, %p145
      %p147 = scmp.ne.s32.totalorder %s138, %s139
      %p148 = scmp.eq.s32.totalorder %s23, 0
      %p149 = por %p147, %p148
      %p150 = scmp.ne.s32.totalorder %s138, %s139
      %p151 = scmp.eq.s32.totalorder %s24, 1
      %p152 = por %p150, %p151
      %p154 = scmp.ne.s32.totalorder %s139, %s153
      %p155 = scmp.eq.s32.totalorder %s24, 0
      %p156 = por %p154, %p155
      %s158 = sadd.s32 %s157, 1
      %p161 = scmp.eq.s32.totalorder %s18, 1
      %p162 = scmp.ne.s32.totalorder %s157, %s159
      %p163 = scmp.eq.s32.totalorder %s18, 0
      %p164 = por %p162, %p163
      %p165 = scmp.ne.s32.totalorder %s157, %s159
      %p166 = scmp.eq.s32.totalorder %s23, 1
      %p167 = por %p165, %p166
      %p168 = scmp.ne.s32.totalorder %s159, %s160
      %p169 = scmp.eq.s32.totalorder %s23, 0
      %p170 = por %p168, %p169
      %p171 = scmp.ne.s32.totalorder %s159, %s160
      %p172 = scmp.eq.s32.totalorder %s24, 1
      %p173 = por %p171, %p172
      %p175 = scmp.ne.s32.totalorder %s160, %s174
      %p176 = scmp.eq.s32.totalorder %s24, 0
      %p177 = por %p175, %p176
      %s178 = ssub.s32 %s18, %s25
      %p179 = scmp.eq.s32.totalorder %s178, 0
      %s181 = sadd.s32 %s180, 1
      %s182 = scalar_select %p179, %s180, %s181
      %p185 = pneg %p179
      %p186 = scmp.eq.s32.totalorder %s18, 1
      %p187 = por %p185, %p186
      %p188 = scmp.ne.s32.totalorder %s180, %s183
      %p189 = scmp.eq.s32.totalorder %s18, 0
      %p190 = por %p188, %p189
      %p191 = scmp.ne.s32.totalorder %s180, %s183
      %p192 = scmp.eq.s32.totalorder %s23, 1
      %p193 = por %p191, %p192
      %p194 = scmp.ne.s32.totalorder %s183, %s184
      %p195 = scmp.eq.s32.totalorder %s23, 0
      %p196 = por %p194, %p195
      %p197 = scmp.ne.s32.totalorder %s183, %s184
      %p198 = scmp.eq.s32.totalorder %s24, 1
      %p199 = por %p197, %p198
      %p201 = scmp.ne.s32.totalorder %s184, %s200
      %p202 = scmp.eq.s32.totalorder %s24, 0
      %p203 = por %p201, %p202
      %p204 = scmp.le.s32.totalorder 1, %s18
      %p205 = scmp.lt.s32.totalorder %s18, 3
      %p206 = pnand %p204, %p205
      %p207 = pneg %p206
      // Predicated region
      $region9: #{tpu_custom_call.1} parent=5 // pred_check
        _
      $region10: #{tpu_custom_call.1} parent=5 // pred_check_branch
        %209 = sbr.rel (%p206) target = $region12
      $region11: #{tpu_custom_call.1} parent=5 // pred_region
        %s210 = ssub.s32 %s18, 1
        // Predicated region
        $region13: #{tpu_custom_call.1} parent=11 // pred_check
          %p211 = pneg %p65
        $region14: #{tpu_custom_call.1} parent=11 // pred_check_branch
          %213 = sbr.rel (%p211) target = $region16
        $region15: #{tpu_custom_call.1} parent=11 // pred_region
          _
        $region16: #{tpu_custom_call.1} parent=11 // pred_fallthru
          _
        // Predicated region
        $region17: #{tpu_custom_call.1} parent=11 // pred_check
          %p214 = pneg %p86
        $region18: #{tpu_custom_call.1} parent=11 // pred_check_branch
          %216 = sbr.rel (%p214) target = $region20
        $region19: #{tpu_custom_call.1} parent=11 // pred_region
          _
        $region20: #{tpu_custom_call.1} parent=11 // pred_fallthru
          _
        // Predicated region
        $region21: #{tpu_custom_call.1} parent=11 // pred_check
          %p217 = pneg %p107
        $region22: #{tpu_custom_call.1} parent=11 // pred_check_branch
          %219 = sbr.rel (%p217) target = $region24
        $region23: #{tpu_custom_call.1} parent=11 // pred_region
          _
        $region24: #{tpu_custom_call.1} parent=11 // pred_fallthru
          _
        // Predicated region
        $region25: #{tpu_custom_call.1} parent=11 // pred_check
          %p220 = pneg %p128
        $region26: #{tpu_custom_call.1} parent=11 // pred_check_branch
          %222 = sbr.rel (%p220) target = $region28
        $region27: #{tpu_custom_call.1} parent=11 // pred_region
          _
        $region28: #{tpu_custom_call.1} parent=11 // pred_fallthru
          _
        // Predicated region
        $region29: #{tpu_custom_call.1} parent=11 // pred_check
          %p223 = pneg %p149
        $region30: #{tpu_custom_call.1} parent=11 // pred_check_branch
          %225 = sbr.rel (%p223) target = $region32
        $region31: #{tpu_custom_call.1} parent=11 // pred_region
          _
        $region32: #{tpu_custom_call.1} parent=11 // pred_fallthru
          _
        // Predicated region
        $region33: #{tpu_custom_call.1} parent=11 // pred_check
          %p226 = pneg %p170
        $region34: #{tpu_custom_call.1} parent=11 // pred_check_branch
          %228 = sbr.rel (%p226) target = $region36
        $region35: #{tpu_custom_call.1} parent=11 // pred_region
          _
        $region36: #{tpu_custom_call.1} parent=11 // pred_fallthru
          _
      $region12: #{tpu_custom_call.1} parent=5 // pred_fallthru
        _
      %p229 = scmp.lt.s32.totalorder %s18, 2
      // Predicated region
      $region37: #{tpu_custom_call.1} parent=5 // pred_check
        %p230 = pneg %p229
      $region38: #{tpu_custom_call.1} parent=5 // pred_check_branch
        %232 = sbr.rel (%p230) target = $region40
      $region39: #{tpu_custom_call.1} parent=5 // pred_region
        // Predicated region
        $region41: #{tpu_custom_call.1} parent=39 // pred_check
          %p233 = pneg %p38
        $region42: #{tpu_custom_call.1} parent=39 // pred_check_branch
          %235 = sbr.rel (%p233) target = $region44
        $region43: #{tpu_custom_call.1} parent=39 // pred_region
          %s236 = smul.u32 16, %s18
          %s237 = ssub.s32 25, %s236
          %p238 = scmp.lt.s32.totalorder %s237, 16
          %s239 = scalar_select %p238, %s237, 16
          %s240 = smul.u32 128, %s239
          %p241 = scmp.lt.s32.totalorder %s236, 24
          %s242 = scalar_select %p241, %s236, 24
          %s243 = smul.addr %s242, 8
          %s244 = scalar_lea.vmem %s0, %s243
          %s245 = smul.u32 16, %s18
          %s246 = ssub.s32 25, %s245
          %p247 = scmp.lt.s32.totalorder %s246, 16
          %s248 = scalar_select %p247, %s246, 16
          %s249 = smul.u32 128, %s248
        $region44: #{tpu_custom_call.1} parent=39 // pred_fallthru
          _
      $region40: #{tpu_custom_call.1} parent=5 // pred_fallthru
        _
      %p250 = scmp.le.s32.totalorder 1, %s18
      %p251 = scmp.lt.s32.totalorder %s18, 3
      %p252 = pnand %p250, %p251
      %p253 = pneg %p252
      // Predicated region
      $region45: #{tpu_custom_call.1} parent=5 // pred_check
        _
      $region46: #{tpu_custom_call.1} parent=5 // pred_check_branch
        %255 = sbr.rel (%p252) target = $region48
      $region47: #{tpu_custom_call.1} parent=5 // pred_region
        %s256 = ssub.s32 %s18, 1
        %s257 = smul.u32 16, %s23
        %s258 = ssub.s32 25, %s257
        %p259 = scmp.lt.s32.totalorder %s258, 16
        %s260 = scalar_select %p259, %s258, 16
        %s261 = smul.u32 128, %s260
        %p262 = scmp.lt.s32.totalorder %s257, 24
        %s263 = scalar_select %p262, %s257, 24
        %s264 = smul.addr %s263, 8
        %s265 = scalar_lea.vmem %s0, %s264
        %p266 = pneg %p44
        %p267 = pneg %p41
        %p268 = pneg %p65
        %p269 = pneg %p62
        %p270 = pneg %p86
        %p271 = pneg %p83
        %p272 = pneg %p107
        %p273 = pneg %p104
        %p274 = pneg %p128
        %p275 = pneg %p125
        %p276 = pneg %p149
        %p277 = pneg %p146
        %p278 = pneg %p170
        %p279 = pneg %p167
        %p280 = pneg %p196
        %p281 = pneg %p193
        %s282 = sand.u32 %s183, 1
        %s283 = scalar_lea.sflag [#allocation4], %s282
        %s284 = sand.u32 %s183, 1
        %s285 = scalar_lea.vmem [#allocation3], %s284
        %s286 = smul.u32 16, %s23
        %s287 = ssub.s32 25, %s286
        %p288 = scmp.lt.s32.totalorder %s287, 16
        %s289 = scalar_select %p288, %s287, 16
        %s290 = smul.u32 128, %s289
        %p291 = scmp.lt.s32.totalorder %s286, 24
        %s292 = scalar_select %p291, %s286, 24
        %s293 = smul.addr %s292, 8
        %s294 = scalar_lea.vmem %s0, %s293
        %s295 = smul.u32 16, %s23
        %s296 = ssub.s32 25, %s295
        %p297 = scmp.lt.s32.totalorder %s296, 16
        %s298 = scalar_select %p297, %s296, 16
        %s299 = smul.u32 128, %s298
        %v301 = vld [vmem:[%s294] sm:$0xff]
        %v302 = vld [vmem:[%s294 + $0x8] sm:$0xff]
        %v303 = vld [vmem:[%s294 + $0x10] sm:$0xff]
        %v304 = vld [vmem:[%s294 + $0x18] sm:$0xff]
        %v305 = vld [vmem:[%s294 + $0x20] sm:$0xff]
        %v306 = vld [vmem:[%s294 + $0x28] sm:$0xff]
        %v307 = vld [vmem:[%s294 + $0x30] sm:$0xff]
        %v308 = vld [vmem:[%s294 + $0x38] sm:$0xff]
        %v309 = vld [vmem:[%s294 + $0x40] sm:$0xff]
        %v310 = vld [vmem:[%s294 + $0x48] sm:$0xff]
        %v311 = vld [vmem:[%s294 + $0x50] sm:$0xff]
        %v312 = vld [vmem:[%s294 + $0x58] sm:$0xff]
        %v313 = vld [vmem:[%s294 + $0x60] sm:$0xff]
        %v314 = vld [vmem:[%s294 + $0x68] sm:$0xff]
        %v315 = vld [vmem:[%s294 + $0x70] sm:$0xff]
        %v316 = vld [vmem:[%s294 + $0x78] sm:$0xff]
        %v317 = vpack.c.bf16 %v302, %v301
        %v318 = vpack.c.bf16 %v304, %v303
        %v319 = vpack.c.bf16 %v306, %v305
        %v320 = vpack.c.bf16 %v308, %v307
        %v321 = vpack.c.bf16 %v310, %v309
        %v322 = vpack.c.bf16 %v312, %v311
        %v323 = vpack.c.bf16 %v314, %v313
        %v324 = vpack.c.bf16 %v316, %v315
        %v325 = vld [vmem:[%s1] sm:$0xf]
        %v326 = vld [vmem:[%s1 + $0x4] sm:$0xf]
        %v327 = vld [vmem:[%s2] sm:$0x1]
        %v329 = vlaneseq
        %v330 = vshrl.u32 %v329, 7
        %v331 = vsub.s32 0, %v330
        %v332 = vrot.slane %v327, %v331
        %v336 = vunpack.c.l.b16 %v325
        %v337 = vunpack.c.l.b16 %v326
        %v338 = vpack.c.b16 %v337, %v336
        %vm340 = vcmask 130048
        %v342 = vsel %vm340, %v317, 0
        %v345 = vsel %vm340, %v318, 0
        %v348 = vsel %vm340, %v319, 0
        %v351 = vsel %vm340, %v320, 0
        %v354 = vsel %vm340, %v321, 0
        %v357 = vsel %vm340, %v322, 0
        %v360 = vsel %vm340, %v323, 0
        %v363 = vsel %vm340, %v324, 0
        %365 = vmatprep.subr.bf16.mxu0 0
        %366 = vmatpush1.bf16.msra.mxu0 %v338
        %367 = vmatprep.subr.bf16.mxu0 0
        %368 = vmatpush1.bf16.msra.mxu0 0
        %369 = vmatprep.subr.bf16.mxu0 0
        %370 = vmatpush1.bf16.msra.mxu0 0
        %371 = vmatprep.subr.bf16.mxu0 0
        %372 = vmatpush1.bf16.msra.mxu0 0
        %373 = vmatprep.subr.bf16.mxu0 0
        %374 = vmatpush1.bf16.msra.mxu0 0
        %375 = vmatprep.subr.bf16.mxu0 0
        %376 = vmatpush1.bf16.msra.mxu0 0
        %377 = vmatprep.subr.bf16.mxu0 0
        %378 = vmatpush1.bf16.msra.mxu0 0
        %379 = vmatprep.subr.bf16.mxu0 0
        %380 = vmatpush1.bf16.msra.mxu0 0
        %381 = vmatprep.subr.bf16.mxu0 0
        %382 = vmatpush1.bf16.msra.mxu0 0
        %383 = vmatprep.subr.bf16.mxu0 0
        %384 = vmatpush1.bf16.msra.mxu0 0
        %385 = vmatprep.subr.bf16.mxu0 0
        %386 = vmatpush1.bf16.msra.mxu0 0
        %387 = vmatprep.subr.bf16.mxu0 0
        %388 = vmatpush1.bf16.msra.mxu0 0
        %389 = vmatprep.subr.bf16.mxu0 0
        %390 = vmatpush1.bf16.msra.mxu0 0
        %391 = vmatprep.subr.bf16.mxu0 0
        %392 = vmatpush1.bf16.msra.mxu0 0
        %393 = vmatprep.subr.bf16.mxu0 0
        %394 = vmatpush1.bf16.msra.mxu0 0
        %395 = vmatprep.subr.bf16.mxu0 0
        %396 = vmatpush1.bf16.msra.mxu0 0
        %397 = vmatprep.mubr.bf16.mxu0 0
        %398 = vmatmul.mubr.bf16.gmra.mrb[0].mxu0 %v342
        %v399 = vpop.f32.mrb[0].mxu0
        %v400 = vadd.f32 %v332, %v399
        %v401 = vpop.f32.mrb[0].mxu0
        %v402 = vpop.f32.mrb[0].mxu0
        %v403 = vadd.f32 %v332, %v402
        %v404 = vpop.f32.mrb[0].mxu0
        %405 = vmatprep.mubr.bf16.mxu0 0
        %406 = vmatmul.mubr.bf16.gmra.mrb[0].mxu0 %v345
        %v407 = vpop.f32.mrb[0].mxu0
        %v408 = vadd.f32 %v332, %v407
        %v409 = vpop.f32.mrb[0].mxu0
        %v410 = vpop.f32.mrb[0].mxu0
        %v411 = vadd.f32 %v332, %v410
        %v412 = vpop.f32.mrb[0].mxu0
        %413 = vmatprep.mubr.bf16.mxu0 0
        %414 = vmatmul.mubr.bf16.gmra.mrb[0].mxu0 %v348
        %v415 = vpop.f32.mrb[0].mxu0
        %v416 = vadd.f32 %v332, %v415
        %v417 = vpop.f32.mrb[0].mxu0
        %v418 = vpop.f32.mrb[0].mxu0
        %v419 = vadd.f32 %v332, %v418
        %v420 = vpop.f32.mrb[0].mxu0
        %421 = vmatprep.mubr.bf16.mxu0 0
        %422 = vmatmul.mubr.bf16.gmra.mrb[0].mxu0 %v351
        %v423 = vpop.f32.mrb[0].mxu0
        %v424 = vadd.f32 %v332, %v423
        %v425 = vpop.f32.mrb[0].mxu0
        %v426 = vpop.f32.mrb[0].mxu0
        %v427 = vadd.f32 %v332, %v426
        %v428 = vpop.f32.mrb[0].mxu0
        %429 = vmatprep.mubr.bf16.mxu0 0
        %430 = vmatmul.mubr.bf16.gmra.mrb[0].mxu0 %v354
        %v431 = vpop.f32.mrb[0].mxu0
        %v432 = vadd.f32 %v332, %v431
        %v433 = vpop.f32.mrb[0].mxu0
        %v434 = vpop.f32.mrb[0].mxu0
        %v435 = vadd.f32 %v332, %v434
        %v436 = vpop.f32.mrb[0].mxu0
        %437 = vmatprep.mubr.bf16.mxu0 0
        %438 = vmatmul.mubr.bf16.gmra.mrb[0].mxu0 %v357
        %v439 = vpop.f32.mrb[0].mxu0
        %v440 = vadd.f32 %v332, %v439
        %v441 = vpop.f32.mrb[0].mxu0
        %v442 = vpop.f32.mrb[0].mxu0
        %v443 = vadd.f32 %v332, %v442
        %v444 = vpop.f32.mrb[0].mxu0
        %445 = vmatprep.mubr.bf16.mxu0 0
        %446 = vmatmul.mubr.bf16.gmra.mrb[0].mxu0 %v360
        %v447 = vpop.f32.mrb[0].mxu0
        %v448 = vadd.f32 %v332, %v447
        %v449 = vpop.f32.mrb[0].mxu0
        %v450 = vpop.f32.mrb[0].mxu0
        %v451 = vadd.f32 %v332, %v450
        %v452 = vpop.f32.mrb[0].mxu0
        %453 = vmatprep.mubr.bf16.mxu0 0
        %454 = vmatmul.mubr.bf16.gmra.mrb[0].mxu0 %v363
        %v455 = vpop.f32.mrb[0].mxu0
        %v456 = vadd.f32 %v332, %v455
        %v457 = vpop.f32.mrb[0].mxu0
        %v458 = vpop.f32.mrb[0].mxu0
        %v459 = vadd.f32 %v332, %v458
        %v460 = vpop.f32.mrb[0].mxu0
        %461 = vdwg.mxu0
        %v462 = vtanh.pop %v400
        %v463 = vtanh.pop %v403
        %v464 = vtanh.pop %v408
        %v465 = vtanh.pop %v411
        %v466 = vtanh.pop %v416
        %v467 = vtanh.pop %v419
        %v468 = vtanh.pop %v424
        %v469 = vtanh.pop %v427
        %v470 = vtanh.pop %v432
        %v471 = vtanh.pop %v435
        %v472 = vtanh.pop %v440
        %v473 = vtanh.pop %v443
        %v474 = vtanh.pop %v448
        %v475 = vtanh.pop %v451
        %v476 = vtanh.pop %v456
        %v477 = vtanh.pop %v459
        %v478 = vpack.c.bf16 %v463, %v462
        %v479 = vpack.c.bf16 %v465, %v464
        %v480 = vpack.c.bf16 %v467, %v466
        %v481 = vpack.c.bf16 %v469, %v468
        %v482 = vpack.c.bf16 %v471, %v470
        %v483 = vpack.c.bf16 %v473, %v472
        %v484 = vpack.c.bf16 %v475, %v474
        %v485 = vpack.c.bf16 %v477, %v476
        %v486 = vld [vmem:[%s3] sm:$0xf]
        %v487 = vld [vmem:[%s3 + $0x4] sm:$0xf]
        %v488 = vld [vmem:[%s3 + $0x8] sm:$0xf]
        %v489 = vld [vmem:[%s3 + $0xc] sm:$0xf]
        %v490 = vld [vmem:[%s3 + $0x10] sm:$0xf]
        %v491 = vld [vmem:[%s3 + $0x14] sm:$0xf]
        %v492 = vld [vmem:[%s3 + $0x18] sm:$0xf]
        %v493 = vld [vmem:[%s3 + $0x1c] sm:$0xf]
        %v494 = vld [vmem:[%s3 + $0x20] sm:$0xf]
        %v495 = vld [vmem:[%s3 + $0x24] sm:$0xf]
        %v496 = vld [vmem:[%s3 + $0x28] sm:$0xf]
        %v497 = vld [vmem:[%s3 + $0x2c] sm:$0xf]
        %v498 = vld [vmem:[%s3 + $0x30] sm:$0xf]
        %v499 = vld [vmem:[%s3 + $0x34] sm:$0xf]
        %v500 = vld [vmem:[%s3 + $0x38] sm:$0xf]
        %v501 = vld [vmem:[%s3 + $0x3c] sm:$0xf]
        %v502 = vld [vmem:[%s4] sm:$0x1]
        %v504 = vlaneseq
        %v505 = vshrl.u32 %v504, 7
        %v506 = vsub.s32 0, %v505
        %v507 = vrot.slane %v502, %v506
        %v525 = vunpack.c.l.b16 %v486
        %v526 = vunpack.c.l.b16 %v487
        %v527 = vunpack.c.l.b16 %v488
        %v528 = vunpack.c.l.b16 %v489
        %v529 = vunpack.c.l.b16 %v490
        %v530 = vunpack.c.l.b16 %v491
        %v531 = vunpack.c.l.b16 %v492
        %v532 = vunpack.c.l.b16 %v493
        %v533 = vunpack.c.l.b16 %v494
        %v534 = vunpack.c.l.b16 %v495
        %v535 = vunpack.c.l.b16 %v496
        %v536 = vunpack.c.l.b16 %v497
        %v537 = vunpack.c.l.b16 %v498
        %v538 = vunpack.c.l.b16 %v499
        %v539 = vunpack.c.l.b16 %v500
        %v540 = vunpack.c.l.b16 %v501
        %v541 = vpack.c.b16 %v526, %v525
        %v542 = vpack.c.b16 %v528, %v527
        %v543 = vpack.c.b16 %v530, %v529
        %v544 = vpack.c.b16 %v532, %v531
        %v545 = vpack.c.b16 %v534, %v533
        %v546 = vpack.c.b16 %v536, %v535
        %v547 = vpack.c.b16 %v538, %v537
        %v548 = vpack.c.b16 %v540, %v539
        %557 = vmatprep.subr.bf16.mxu0 0
        %558 = vmatpush1.bf16.msra.mxu0 %v541
        %559 = vmatprep.subr.bf16.mxu0 0
        %560 = vmatpush1.bf16.msra.mxu0 %v542
        %561 = vmatprep.subr.bf16.mxu0 0
        %562 = vmatpush1.bf16.msra.mxu0 %v543
        %563 = vmatprep.subr.bf16.mxu0 0
        %564 = vmatpush1.bf16.msra.mxu0 %v544
        %565 = vmatprep.subr.bf16.mxu0 0
        %566 = vmatpush1.bf16.msra.mxu0 %v545
        %567 = vmatprep.subr.bf16.mxu0 0
        %568 = vmatpush1.bf16.msra.mxu0 %v546
        %569 = vmatprep.subr.bf16.mxu0 0
        %570 = vmatpush1.bf16.msra.mxu0 %v547
        %571 = vmatprep.subr.bf16.mxu0 0
        %572 = vmatpush1.bf16.msra.mxu0 %v548
        %573 = vmatprep.subr.bf16.mxu0 0
        %574 = vmatpush1.bf16.msra.mxu0 0
        %575 = vmatprep.subr.bf16.mxu0 0
        %576 = vmatpush1.bf16.msra.mxu0 0
        %577 = vmatprep.subr.bf16.mxu0 0
        %578 = vmatpush1.bf16.msra.mxu0 0
        %579 = vmatprep.subr.bf16.mxu0 0
        %580 = vmatpush1.bf16.msra.mxu0 0
        %581 = vmatprep.subr.bf16.mxu0 0
        %582 = vmatpush1.bf16.msra.mxu0 0
        %583 = vmatprep.subr.bf16.mxu0 0
        %584 = vmatpush1.bf16.msra.mxu0 0
        %585 = vmatprep.subr.bf16.mxu0 0
        %586 = vmatpush1.bf16.msra.mxu0 0
        %587 = vmatprep.subr.bf16.mxu0 0
        %588 = vmatpush1.bf16.msra.mxu0 0
        %589 = vmatprep.mubr.bf16.mxu0 0
        %590 = vmatmul.mubr.bf16.gmra.mrb[0].mxu0 %v478
        %v591 = vpop.f32.mrb[0].mxu0
        %v592 = vadd.f32 %v507, %v591
        %v593 = vpop.f32.mrb[0].mxu0
        %v594 = vpop.f32.mrb[0].mxu0
        %v595 = vadd.f32 %v507, %v594
        %v596 = vpop.f32.mrb[0].mxu0
        %597 = vmatprep.mubr.bf16.mxu0 0
        %598 = vmatmul.mubr.bf16.gmra.mrb[0].mxu0 %v479
        %v599 = vpop.f32.mrb[0].mxu0
        %v600 = vadd.f32 %v507, %v599
        %v601 = vpop.f32.mrb[0].mxu0
        %v602 = vpop.f32.mrb[0].mxu0
        %v603 = vadd.f32 %v507, %v602
        %v604 = vpop.f32.mrb[0].mxu0
        %605 = vmatprep.mubr.bf16.mxu0 0
        %606 = vmatmul.mubr.bf16.gmra.mrb[0].mxu0 %v480
        %v607 = vpop.f32.mrb[0].mxu0
        %v608 = vadd.f32 %v507, %v607
        %v609 = vpop.f32.mrb[0].mxu0
        %v610 = vpop.f32.mrb[0].mxu0
        %v611 = vadd.f32 %v507, %v610
        %v612 = vpop.f32.mrb[0].mxu0
        %613 = vmatprep.mubr.bf16.mxu0 0
        %614 = vmatmul.mubr.bf16.gmra.mrb[0].mxu0 %v481
        %v615 = vpop.f32.mrb[0].mxu0
        %v616 = vadd.f32 %v507, %v615
        %v617 = vpop.f32.mrb[0].mxu0
        %v618 = vpop.f32.mrb[0].mxu0
        %v619 = vadd.f32 %v507, %v618
        %v620 = vpop.f32.mrb[0].mxu0
        %621 = vmatprep.mubr.bf16.mxu0 0
        %622 = vmatmul.mubr.bf16.gmra.mrb[0].mxu0 %v482
        %v623 = vpop.f32.mrb[0].mxu0
        %v624 = vadd.f32 %v507, %v623
        %v625 = vpop.f32.mrb[0].mxu0
        %v626 = vpop.f32.mrb[0].mxu0
        %v627 = vadd.f32 %v507, %v626
        %v628 = vpop.f32.mrb[0].mxu0
        %629 = vmatprep.mubr.bf16.mxu0 0
        %630 = vmatmul.mubr.bf16.gmra.mrb[0].mxu0 %v483
        %v631 = vpop.f32.mrb[0].mxu0
        %v632 = vadd.f32 %v507, %v631
        %v633 = vpop.f32.mrb[0].mxu0
        %v634 = vpop.f32.mrb[0].mxu0
        %v635 = vadd.f32 %v507, %v634
        %v636 = vpop.f32.mrb[0].mxu0
        %637 = vmatprep.mubr.bf16.mxu0 0
        %638 = vmatmul.mubr.bf16.gmra.mrb[0].mxu0 %v484
        %v639 = vpop.f32.mrb[0].mxu0
        %v640 = vadd.f32 %v507, %v639
        %v641 = vpop.f32.mrb[0].mxu0
        %v642 = vpop.f32.mrb[0].mxu0
        %v643 = vadd.f32 %v507, %v642
        %v644 = vpop.f32.mrb[0].mxu0
        %645 = vmatprep.mubr.bf16.mxu0 0
        %646 = vmatmul.mubr.bf16.gmra.mrb[0].mxu0 %v485
        %v647 = vpop.f32.mrb[0].mxu0
        %v648 = vadd.f32 %v507, %v647
        %v649 = vpop.f32.mrb[0].mxu0
        %v650 = vpop.f32.mrb[0].mxu0
        %v651 = vadd.f32 %v507, %v650
        %v652 = vpop.f32.mrb[0].mxu0
        %653 = vdwg.mxu0
        %v654 = vtanh.pop %v592
        %v655 = vtanh.pop %v595
        %v656 = vtanh.pop %v600
        %v657 = vtanh.pop %v603
        %v658 = vtanh.pop %v608
        %v659 = vtanh.pop %v611
        %v660 = vtanh.pop %v616
        %v661 = vtanh.pop %v619
        %v662 = vtanh.pop %v624
        %v663 = vtanh.pop %v627
        %v664 = vtanh.pop %v632
        %v665 = vtanh.pop %v635
        %v666 = vtanh.pop %v640
        %v667 = vtanh.pop %v643
        %v668 = vtanh.pop %v648
        %v669 = vtanh.pop %v651
        %v670 = vld [vmem:[%s5] sm:$0x1]
        %v671 = vpack.c.bf16 %v655, %v654
        %v672 = vpack.c.bf16 %v657, %v656
        %v673 = vpack.c.bf16 %v659, %v658
        %v674 = vpack.c.bf16 %v661, %v660
        %v675 = vpack.c.bf16 %v663, %v662
        %v676 = vpack.c.bf16 %v665, %v664
        %v677 = vpack.c.bf16 %v667, %v666
        %v678 = vpack.c.bf16 %v669, %v668
        %v679 = vld [vmem:[#allocation2] sm:$0x1]
        %681 = vset.pattern.permute.xlu0 0
        %682 = vperm.xlu0 %681, %v679
        %v683 = vpop.permute.xlu0 %682
        %v685 = vlaneseq
        %v686 = vshrl.u32 %v685, 7
        %v687 = vsub.s32 0, %v686
        %v688 = vrot.slane %v683, %v687
        %689 = vmatprep.subr.bf16.mxu0 0
        %690 = vmatpush1.bf16.xpose.msra.mxu0 %v671
        %691 = vmatprep.subr.bf16.mxu0 0
        %692 = vmatpush1.bf16.xpose.msra.mxu0 %v672
        %693 = vmatprep.subr.bf16.mxu0 0
        %694 = vmatpush1.bf16.xpose.msra.mxu0 %v673
        %695 = vmatprep.subr.bf16.mxu0 0
        %696 = vmatpush1.bf16.xpose.msra.mxu0 %v674
        %697 = vmatprep.subr.bf16.mxu0 0
        %698 = vmatpush1.bf16.xpose.msra.mxu0 %v675
        %699 = vmatprep.subr.bf16.mxu0 0
        %700 = vmatpush1.bf16.xpose.msra.mxu0 %v676
        %701 = vmatprep.subr.bf16.mxu0 0
        %702 = vmatpush1.bf16.xpose.msra.mxu0 %v677
        %703 = vmatprep.subr.bf16.mxu0 0
        %704 = vmatpush1.bf16.xpose.msra.mxu0 %v678
        %705 = vmatprep.subr.bf16.mxu0 0
        %706 = vmatpush1.bf16.xpose.msra.mxu0 0
        %707 = vmatprep.subr.bf16.mxu0 0
        %708 = vmatpush1.bf16.xpose.msra.mxu0 0
        %709 = vmatprep.subr.bf16.mxu0 0
        %710 = vmatpush1.bf16.xpose.msra.mxu0 0
        %711 = vmatprep.subr.bf16.mxu0 0
        %712 = vmatpush1.bf16.xpose.msra.mxu0 0
        %713 = vmatprep.subr.bf16.mxu0 0
        %714 = vmatpush1.bf16.xpose.msra.mxu0 0
        %715 = vmatprep.subr.bf16.mxu0 0
        %716 = vmatpush1.bf16.xpose.msra.mxu0 0
        %717 = vmatprep.subr.bf16.mxu0 0
        %718 = vmatpush1.bf16.xpose.msra.mxu0 0
        %719 = vmatprep.subr.bf16.mxu0 0
        %720 = vmatpush1.bf16.xpose.msra.mxu0 0
        %721 = vmatprep.mubr.bf16.mxu0 0
        %722 = vmatmul.mubr.bf16.gmra.mrb[0].mxu0 %v670
        %v723 = vpop.f32.mrb[0].mxu0
        %v724 = vadd.f32 %v688, %v723
        %v725 = vpop.f32.mrb[0].mxu0
        %v726 = vpop.f32.mrb[0].mxu0
        %v727 = vpop.f32.mrb[0].mxu0
        %728 = vdwg.mxu0
        %729 = vst [vmem:[%s285] sm:$0x1] %v724
        %s730 = sand.u32 %s183, 1
        %s731 = scalar_lea.sflag [#allocation4], %s730
        %s732 = sand.u32 %s183, 1
        %s733 = scalar_lea.vmem [#allocation3], %s732
        // Predicated region
        $region49: #{tpu_custom_call.1} parent=47 // pred_check
          %p734 = pneg %p193
        $region50: #{tpu_custom_call.1} parent=47 // pred_check_branch
          %736 = sbr.rel (%p734) target = $region52
        $region51: #{tpu_custom_call.1} parent=47 // pred_region
          %s738 = ssub.s32 16, 16
          %739 = vsyncadd %s731, %s738
          %s740 = smul.addr %s23, 16
          %s741 = scalar_lea.hbm %s7, %s740
          %s743 = sshll.u32 %s733, 4
          %s744 = int_to_ptr.vmem [resolvable:$true] %s743
          %746 = dma.vmem_to_hbm [thread:$0]  %s744, 16, %s741, %s731
        $region52: #{tpu_custom_call.1} parent=47 // pred_fallthru
          _
      $region48: #{tpu_custom_call.1} parent=5 // pred_fallthru
        _
      %p747 = scmp.le.s32.totalorder 2, %s18
      // Predicated region
      $region53: #{tpu_custom_call.1} parent=5 // pred_check
        %p748 = pneg %p747
      $region54: #{tpu_custom_call.1} parent=5 // pred_check_branch
        %750 = sbr.rel (%p748) target = $region56
      $region55: #{tpu_custom_call.1} parent=5 // pred_region
        %s751 = ssub.s32 %s18, 2
        // Predicated region
        $region57: #{tpu_custom_call.1} parent=55 // pred_check
          %p752 = pneg %p199
        $region58: #{tpu_custom_call.1} parent=55 // pred_check_branch
          %754 = sbr.rel (%p752) target = $region60
        $region59: #{tpu_custom_call.1} parent=55 // pred_region
          %s755 = sand.u32 %s184, 1
          %s756 = scalar_lea.sflag [#allocation4], %s755
          %s757 = sand.u32 %s184, 1
          %s758 = scalar_lea.vmem [#allocation3], %s757
          %759 = dma.done %s756, 16
        $region60: #{tpu_custom_call.1} parent=55 // pred_fallthru
          _
      $region56: #{tpu_custom_call.1} parent=5 // pred_fallthru
        _
    $region6: #{tpu_custom_call.1} parent=1 // loop_footer
      %s22 = sadd.s32 1, %s18
    $region7: #{tpu_custom_call.1} parent=1 // loop_footer_branch
      %17 = sbr.rel target = $region3
    $region8: #{tpu_custom_call.1} parent=1 // loop_exit
      _
    %760 = vsyncpa [#allocation4], 1
    %s761 = scalar_lea.sflag [#allocation4], 1
    %762 = vsyncpa %s761, 1

</llo_original>
